<compile_context>
chip_gen: v5e
topology: v5e:2x2
jax: 0.10.0
libtpu: 0.0.40
codegen_flags: <defaults>
</compile_context>

<pallas_src>
import functools

import jax
import jax.numpy as jnp
from jax.experimental import pallas as pl
from jax.experimental.pallas import tpu as pltpu

NUM_CLASSES = 256
_MAX_TILE_ROWS = 2048                 # ~2 MiB f32 logits per tile; multiple of 16 for bf16
_VMEM_LIMIT_BYTES = 32 * 1024 * 1024  # safe scoped limit on v5e/v6e/v7x


def _round_up(x, m):
    return (x + m - 1) // m * m


def _ce_loss_kernel(logits_ref, tgt_ref, out_ref, *, n_valid, tile_rows):
    i = pl.program_id(0)  # row-tile index (reduction / "arbitrary" axis)

    @pl.when(i == 0)
    def _init():
        out_ref[...] = jnp.zeros_like(out_ref)

    x = logits_ref[...].astype(jnp.float32)            # (TILE, 256), cast in-register
    t = tgt_ref[...]                                    # (TILE, 1) int32
    rows, classes = x.shape

    # Numerically stable log-sum-exp per row (XLU reduce + EUP exp/log).
    m = jnp.max(x, axis=-1, keepdims=True)                                  # (TILE, 1)
    lse = m + jnp.log(jnp.sum(jnp.exp(x - m), axis=-1, keepdims=True))      # (TILE, 1)

    # Gather the logit at the target class: lane-iota compare + select (no one-hot
    # multiply / convert).
    class_ids = jax.lax.broadcasted_iota(jnp.int32, (rows, classes), 1)
    tgt_logit = jnp.sum(jnp.where(class_ids == t, x, 0.0), axis=-1,
                        keepdims=True)                                       # (TILE, 1)

    # Mask rows past the true row count.  The last grid step's block may extend past
    # the (unpadded) logits array; the garbage rows are discarded here via select, so
    # any NaN/Inf in them cannot propagate.
    row_ids = i * tile_rows + jax.lax.broadcasted_iota(jnp.int32, (rows, 1), 0)
    nll = jnp.where(row_ids < n_valid, lse - tgt_logit, 0.0)                 # (TILE, 1)

    # Accumulate into the VMEM-resident (1,1) output block.
    out_ref[...] += jnp.sum(nll, keepdims=True)


def vqvae_loss(output, target):
    """Equivalent of nn.CrossEntropyLoss()(output.view(-1, 256), target.long().view(-1))."""
    # Like the PyTorch spec, assumes the class dim is innermost when flattening.
    logits = output.reshape(-1, NUM_CLASSES)            # native dtype (f32 / bf16) streamed
    tgt = target.reshape(-1).astype(jnp.int32)
    n = logits.shape[0]

    tile_rows = min(_MAX_TILE_ROWS, _round_up(n, 16))
    num_tiles = pl.cdiv(n, tile_rows)

    # Logits stay unpadded (edge tile is a partial block, masked in-kernel).  Only the
    # tiny int32 target column is padded so its blocks never go out of range.
    padded_tgt_rows = num_tiles * tile_rows
    if padded_tgt_rows != n:
        tgt = jnp.pad(tgt, ((0, padded_tgt_rows - n),))
    tgt = tgt.reshape(-1, 1)                            # (padded, 1) int32 column

    kernel = functools.partial(_ce_loss_kernel, n_valid=n, tile_rows=tile_rows)

    itemsize = jnp.dtype(logits.dtype).itemsize
    cost = pl.CostEstimate(
        flops=int(n * NUM_CLASSES * 6),
        transcendentals=int(n * (NUM_CLASSES + 1)),
        bytes_accessed=int(n * NUM_CLASSES * itemsize + padded_tgt_rows * 4 + 4),
    )

    total = pl.pallas_call(
        kernel,
        out_shape=jax.ShapeDtypeStruct((1, 1), jnp.float32),
        grid_spec=pltpu.PrefetchScalarGridSpec(
            num_scalar_prefetch=0,
            grid=(num_tiles,),
            in_specs=[
                pl.BlockSpec((tile_rows, NUM_CLASSES), lambda i: (i, 0)),
                pl.BlockSpec((tile_rows, 1), lambda i: (i, 0)),
            ],
            out_specs=pl.BlockSpec((1, 1), lambda i: (0, 0)),
        ),
        compiler_params=pltpu.CompilerParams(
            dimension_semantics=("arbitrary",),
            vmem_limit_bytes=_VMEM_LIMIT_BYTES),
        cost_estimate=cost,
    )(logits, tgt)

    return total[0, 0] * (1.0 / n)                      # reduction='mean'


def _reference_loss(output, target):
    logits = output.reshape(-1, NUM_CLASSES).astype(jnp.float32)
    tgt = target.reshape(-1).astype(jnp.int32)
    logp = jax.nn.log_softmax(logits, axis=-1)
    return -jnp.mean(jnp.take_along_axis(logp, tgt[:, None], axis=-1))


if __name__ == "__main__":
    key = jax.random.PRNGKey(0)
    k1, k2, k3, k4, k5, k6 = jax.random.split(key, 6)

    # --- primary demo: the spec's shape -> view(-1, 256) = (8, 256) rows --------------
    output = jax.random.normal(k1, (2, 4, 16, 16), dtype=jnp.float32)
    target = jax.random.randint(k2, (2, 4), 0, NUM_CLASSES, dtype=jnp.int32)
    loss = jax.block_until_ready(vqvae_loss(output, target))
    ref = jax.block_until_ready(_reference_loss(output, target))
    assert jnp.allclose(loss, ref, rtol=1e-5, atol=1e-5), (loss, ref)

    # --- bf16 input, 51 rows (native-dtype streaming + partial edge block masking) ----
    out_bf16 = jax.random.normal(k3, (3, 17, 16, 16), dtype=jnp.bfloat16)
    tgt_bf16 = jax.random.randint(k4, (3, 17), 0, NUM_CLASSES, dtype=jnp.int32)
    loss_b = jax.block_until_ready(vqvae_loss(out_bf16, tgt_bf16))
    ref_b = jax.block_until_ready(_reference_loss(out_bf16, tgt_bf16))
    assert jnp.allclose(loss_b, ref_b, rtol=2e-5, atol=2e-5), (loss_b, ref_b)

    # --- larger f32 input: 2176 rows -> 2 tiles, second one partial + masked ----------
    out_big = jax.random.normal(k5, (17, 128, 16, 16), dtype=jnp.float32)
    tgt_big = jax.random.randint(k6, (17, 128), 0, NUM_CLASSES, dtype=jnp.int32)
    loss_big = jax.block_until_ready(vqvae_loss(out_big, tgt_big))
    ref_big = jax.block_until_ready(_reference_loss(out_big, tgt_big))
    assert jnp.allclose(loss_big, ref_big, rtol=2e-5, atol=2e-5), (loss_big, ref_big)

    print("KERNEL_OK")
</pallas_src>

<mosaic_0001>
module attributes {stable_mosaic.version = 11 : i64} {
  func.func @_ce_loss_kernel(%arg0: i32, %arg1: memref<16x256xf32, #tpu.memory_space<vmem>>, %arg2: memref<16x1xi32, #tpu.memory_space<vmem>>, %arg3: memref<1x1xf32, #tpu.memory_space<vmem>>) attributes {dimension_semantics = [#tpu.dimension_semantics<arbitrary>], iteration_bounds = array<i64: 1>, scalar_prefetch = 0 : i64, scratch_operands = 0 : i64, tpu.core_type = #tpu.core_type<tc>, window_params = [{transform_indices = @transform_0, window_bounds = array<i64: 16, 256>}, {transform_indices = @transform_1, window_bounds = array<i64: 16, 1>}, {pipeline_mode = #tpu.pipeline_mode<synchronous>, transform_indices = @transform_2, window_bounds = array<i64: 1, 1>}]} {
    %c0_i32 = arith.constant 0 : i32
    %0 = arith.cmpi eq, %arg0, %c0_i32 : i32
    %1 = arith.extui %0 : i1 to i32
    %c0_i32_0 = arith.constant 0 : i32
    %2 = arith.cmpi ne, %1, %c0_i32_0 : i32
    scf.if %2 {
      %cst_13 = arith.constant 0.000000e+00 : f32
      %38 = vector.broadcast %cst_13 : f32 to vector<1x1xf32>
      %c0_14 = arith.constant 0 : index
      %c0_15 = arith.constant 0 : index
      %39 = vector.load %arg3[%c0_14, %c0_15] : memref<1x1xf32, #tpu.memory_space<vmem>>, vector<1x1xf32>
      tpu.vector_store %arg3[%c0_14, %c0_15], %38 {strides = array<i32>} : memref<1x1xf32, #tpu.memory_space<vmem>>, vector<1x1xf32>,
    } else {
    }
    %c0 = arith.constant 0 : index
    %c0_1 = arith.constant 0 : index
    %3 = vector.load %arg1[%c0, %c0_1] : memref<16x256xf32, #tpu.memory_space<vmem>>, vector<16x256xf32>
    %c0_2 = arith.constant 0 : index
    %c0_3 = arith.constant 0 : index
    %4 = vector.load %arg2[%c0_2, %c0_3] : memref<16x1xi32, #tpu.memory_space<vmem>>, vector<16x1xi32>
    %cst = arith.constant dense<0xFF800000> : vector<16xf32>
    %5 = vector.multi_reduction <maximumf>, %3, %cst [1] : vector<16x256xf32> to vector<16xf32>
    %6 = vector.shape_cast %5 : vector<16xf32> to vector<16x1xf32>
    %7 = vector.broadcast %6 : vector<16x1xf32> to vector<16x256xf32>
    %8 = arith.subf %3, %7 : vector<16x256xf32>
    %9 = math.exp %8 : vector<16x256xf32>
    %cst_4 = arith.constant dense<0.000000e+00> : vector<16xf32>
    %10 = vector.multi_reduction <add>, %9, %cst_4 [1] : vector<16x256xf32> to vector<16xf32>
    %11 = vector.shape_cast %10 : vector<16xf32> to vector<16x1xf32>
    %12 = math.log %11 : vector<16x1xf32>
    %13 = arith.addf %6, %12 : vector<16x1xf32>
    %14 = tpu.iota {dimensions = array<i32: 1>} : vector<16x256xi32>
    %15 = vector.broadcast %4 : vector<16x1xi32> to vector<16x256xi32>
    %16 = arith.cmpi eq, %14, %15 : vector<16x256xi32>
    %cst_5 = arith.constant 0.000000e+00 : f32
    %17 = vector.broadcast %cst_5 : f32 to vector<16x256xf32>
    %18 = arith.select %16, %3, %17 : vector<16x256xi1>, vector<16x256xf32>
    %cst_6 = arith.constant dense<0.000000e+00> : vector<16xf32>
    %19 = vector.multi_reduction <add>, %18, %cst_6 [1] : vector<16x256xf32> to vector<16xf32>
    %20 = vector.shape_cast %19 : vector<16xf32> to vector<16x1xf32>
    %c16_i32 = arith.constant 16 : i32
    %21 = arith.muli %arg0, %c16_i32 : i32
    %22 = tpu.iota {dimensions = array<i32: 0>} : vector<16x1xi32>
    %23 = vector.broadcast %21 : i32 to vector<16x1xi32>
    %24 = arith.addi %23, %22 : vector<16x1xi32>
    %c8_i32 = arith.constant 8 : i32
    %25 = vector.broadcast %c8_i32 : i32 to vector<16x1xi32>
    %26 = arith.cmpi slt, %24, %25 : vector<16x1xi32>
    %27 = arith.subf %13, %20 : vector<16x1xf32>
    %cst_7 = arith.constant 0.000000e+00 : f32
    %28 = vector.broadcast %cst_7 : f32 to vector<16x1xf32>
    %29 = arith.select %26, %27, %28 : vector<16x1xi1>, vector<16x1xf32>
    %c0_8 = arith.constant 0 : index
    %c0_9 = arith.constant 0 : index
    %30 = vector.load %arg3[%c0_8, %c0_9] : memref<1x1xf32, #tpu.memory_space<vmem>>, vector<1x1xf32>
    %31 = vector.shape_cast %29 : vector<16x1xf32> to vector<1x16x1xf32>
    %cst_10 = arith.constant dense<0.000000e+00> : vector<1xf32>
    %32 = vector.multi_reduction <add>, %31, %cst_10 [1, 2] : vector<1x16x1xf32> to vector<1xf32>
    %33 = vector.shape_cast %32 : vector<1xf32> to vector<1x1x1xf32>
    %34 = vector.extract %33[0, 0, 0] : f32 from vector<1x1x1xf32>
    %35 = vector.broadcast %34 : f32 to vector<1x1xf32>
    %36 = arith.addf %30, %35 : vector<1x1xf32>
    %c0_11 = arith.constant 0 : index
    %c0_12 = arith.constant 0 : index
    %37 = vector.load %arg3[%c0_11, %c0_12] : memref<1x1xf32, #tpu.memory_space<vmem>>, vector<1x1xf32>
    tpu.vector_store %arg3[%c0_11, %c0_12], %36 {strides = array<i32>} : memref<1x1xf32, #tpu.memory_space<vmem>>, vector<1x1xf32>,
    return
  }
  func.func @transform_0(%arg0: i32) -> (i32, i32) {
    %c0_i32 = arith.constant 0 : i32
    %c0_i32_0 = arith.constant 0 : i32
    return %arg0, %c0_i32 : i32, i32
  }
  func.func @transform_1(%arg0: i32) -> (i32, i32) {
    %c0_i32 = arith.constant 0 : i32
    %c0_i32_0 = arith.constant 0 : i32
    return %arg0, %c0_i32 : i32, i32
  }
  func.func @transform_2(%arg0: i32) -> (i32, i32) {
    %c0_i32 = arith.constant 0 : i32
    %c0_i32_0 = arith.constant 0 : i32
    %c0_i32_1 = arith.constant 0 : i32
    return %c0_i32, %c0_i32_0 : i32, i32
  }
}

</mosaic_0001>

<llo_original>
// kernel: tpu_custom_call.1
$region0: #{tpu_custom_call.1}
  #allocation0 [shape = 'u32[]', space=smem, size = 0x4, offset = 0x4, fixed_abs, tag = 'smem constant byte address 0x4 - core index']
  #allocation1 [shape = 'u32[72,128]{1,0:T(1,128)}', space=vmem, size = 0x9000, scoped, tag = 'internal scratch']
  %s0 = inlined_call_operand.vmem [shape: f32[8,256], index: 0, kind: input, shape index: {}]
  %s1 = inlined_call_operand.vmem [shape: s32[16,1], index: 1, kind: input, shape index: {}]
  %s2 = inlined_call_operand.hbm [shape: f32[1,1], index: 2, kind: output, shape index: {}]
  %s3 = sld [smem:[#allocation0]]
  $region22: #{tpu_custom_call.1} parent=0
    _
  %s5 = ssub.s32 1, %s3
  %s6 = scalar_select 0, %s5, %s3
  $region1: #{tpu_custom_call.1} parent=0
    #allocation2 [shape = 'u8[512]{0}', space=vmem, size = 0x400, scoped, tag = 'output window, operand 0, single buffered']
    #allocation3 [shape = 's32[1]{0}', space=sflag, size = 0x4, scoped, tag = 'scoped memory for tpu_custom_call.1']
    %7 = vsyncpa [#allocation3], 0
    // Predicated region
    $region2: #{tpu_custom_call.1} parent=1 // pred_check
      _
    $region3: #{tpu_custom_call.1} parent=1 // pred_check_branch
      %9 = sbr.rel (0) target = $region5
    $region4: #{tpu_custom_call.1} parent=1 // pred_region
      _
    $region5: #{tpu_custom_call.1} parent=1 // pred_fallthru
      _
    // Predicated region
    $region6: #{tpu_custom_call.1} parent=1 // pred_check
      _
    $region7: #{tpu_custom_call.1} parent=1 // pred_check_branch
      %11 = sbr.rel (0) target = $region9
    $region8: #{tpu_custom_call.1} parent=1 // pred_region
      _
    $region9: #{tpu_custom_call.1} parent=1 // pred_fallthru
      _
    %p12 = scmp.eq.s32.totalorder 0, 0
    // Predicated region
    $region10: #{tpu_custom_call.1} parent=1 // pred_check
      %p13 = pneg %p12
    $region11: #{tpu_custom_call.1} parent=1 // pred_check_branch
      %15 = sbr.rel (%p13) target = $region13
    $region12: #{tpu_custom_call.1} parent=1 // pred_region
      %vm16 = vcmask 0
      %17 = vst.msk [vmem:[#allocation2] sm:$0x1] %vm16, 0.0
    $region13: #{tpu_custom_call.1} parent=1 // pred_fallthru
      _
    %v18 = vld [vmem:[%s0] sm:$0xff]
    %v19 = vld [vmem:[%s0 + $0x8] sm:$0xff]
    %v20 = vld [vmem:[%s0 + $0x10] sm:$0xff]
    %v21 = vld [vmem:[%s0 + $0x18] sm:$0xff]
    %v22 = vld [vmem:[%s1] sm:$0xff]
    %v23 = vld [vmem:[%s1 + $0x8] sm:$0xff]
    %v24 = vmax.f32 %v18, %v19
    %25 = vmax.xlane.f32.xlu0 %v24
    %v26 = vpop.xlane.xlu0 %25
    %v27 = vmax.f32 %v20, %v21
    %28 = vmax.xlane.f32.xlu0 %v27
    %v29 = vpop.xlane.xlu0 %28
    %v30 = vsub.f32 %v18, %v26
    %v31 = vsub.f32 %v19, %v26
    %v32 = vsub.f32 %v20, %v29
    %v33 = vsub.f32 %v21, %v29
    %v34 = vmul.f32 %v30, 1.442695
    %v35 = vpow.pop %v34
    %v36 = vmul.f32 %v31, 1.442695
    %v37 = vpow.pop %v36
    %v38 = vmul.f32 %v32, 1.442695
    %v39 = vpow.pop %v38
    %v40 = vmul.f32 %v33, 1.442695
    %v41 = vpow.pop %v40
    %v42 = vadd.f32 %v35, %v37
    %43 = vadd.xlane.f32.xlu0 %v42
    %v44 = vpop.xlane.xlu0 %43
    %v45 = vadd.f32 %v39, %v41
    %46 = vadd.xlane.f32.xlu0 %v45
    %v47 = vpop.xlane.xlu0 %46
    %v48 = vlog2.pop %v44
    %v49 = vmul.f32 %v48, 0.6931472
    %v50 = vlog2.pop %v47
    %v51 = vmul.f32 %v50, 0.6931472
    %v52 = vadd.f32 %v26, %v49
    %v53 = vadd.f32 %v29, %v51
    %v54 = vlaneseq
    %v55 = vand.u32 %v54, 127
    %v56 = vadd.s32 %v55, 128
    %57 = vset.pattern.permute.xlu0 0
    %58 = vperm.xlu0 %57, %v22
    %v59 = vpop.permute.xlu0 %58
    %60 = vset.pattern.permute.xlu0 0
    %61 = vperm.xlu0 %60, %v23
    %v62 = vpop.permute.xlu0 %61
    %vm63 = vcmp.eq.s32.totalorder %v55, %v59
    %vm64 = vcmp.eq.s32.totalorder %v56, %v59
    %vm65 = vcmp.eq.s32.totalorder %v55, %v62
    %vm66 = vcmp.eq.s32.totalorder %v56, %v62
    %v67 = vsel %vm63, %v18, 0.0
    %v68 = vsel %vm64, %v19, 0.0
    %v69 = vsel %vm65, %v20, 0.0
    %v70 = vsel %vm66, %v21, 0.0
    %v71 = vadd.f32 %v67, %v68
    %72 = vadd.xlane.f32.xlu0 %v71
    %v73 = vpop.xlane.xlu0 %72
    %v74 = vadd.f32 %v69, %v70
    %75 = vadd.xlane.f32.xlu0 %v74
    %v76 = vpop.xlane.xlu0 %75
    %s77 = smul.u32 0, 16
    %v78 = vlaneseq
    %v79 = vshrl.u32 %v78, 7
    %v80 = vadd.s32 %v79, 8
    %v81 = vstv %s77
    %v82 = vadd.s32 %v81, %v79
    %v83 = vadd.s32 %v81, %v80
    %vm84 = vcmp.lt.s32.totalorder %v82, 8
    %vm85 = vcmp.lt.s32.totalorder %v83, 8
    %v86 = vsub.f32 %v52, %v73
    %v87 = vsub.f32 %v53, %v76
    %v88 = vsel %vm84, %v86, 0.0
    %v89 = vsel %vm85, %v87, 0.0
    %v90 = vld [vmem:[#allocation2] sm:$0x1]
    %vm91 = vcmask 7168
    %v92 = vsel %vm91, %v88, 0.0
    %v93 = vsel %vm91, %v89, 0.0
    %v94 = vadd.f32 %v92, %v93
    %95 = vadd.xlane.f32.xlu0 %v94
    %v96 = vpop.xlane.xlu0 %95
    %v97 = vrot.slane %v96, 4
    %v98 = vadd.f32 %v96, %v97
    %v99 = vrot.slane %v98, 2
    %v100 = vadd.f32 %v98, %v99
    %v101 = vrot.slane %v100, 1
    %v102 = vadd.f32 %v100, %v101
    %s103 = vtos %v102
    %v104 = vstv %s103
    %v105 = vadd.f32 %v90, %v104
    %vm106 = vcmask 0
    %107 = vst.msk [vmem:[#allocation2] sm:$0x1] %vm106, %v105
    // Predicated region
    $region14: #{tpu_custom_call.1} parent=1 // pred_check
      _
    $region15: #{tpu_custom_call.1} parent=1 // pred_check_branch
      %109 = sbr.rel (0) target = $region17
    $region16: #{tpu_custom_call.1} parent=1 // pred_region
      %111 = vsyncadd [#allocation3], 0
      %s113 = sshll.u32 [#allocation2], 4
      %s114 = int_to_ptr.vmem [resolvable:$true] %s113
      %s115 = sshll.u32 %s2, 4
      %s116 = int_to_ptr.hbm [resolvable:$true] %s115
      %118 = dma.vmem_to_hbm [thread:$0]  %s114, 16, %s116, [#allocation3]
    $region17: #{tpu_custom_call.1} parent=1 // pred_fallthru
      _
    // Predicated region
    $region18: #{tpu_custom_call.1} parent=1 // pred_check
      _
    $region19: #{tpu_custom_call.1} parent=1 // pred_check_branch
      %120 = sbr.rel (0) target = $region21
    $region20: #{tpu_custom_call.1} parent=1 // pred_region
      %122 = dma.done [#allocation3], 16
    $region21: #{tpu_custom_call.1} parent=1 // pred_fallthru
      _
    %123 = vsyncpa [#allocation3], 1

</llo_original>
